<compile_context>
chip_gen: v5e
topology: v5e:2x2
jax: 0.10.0
libtpu: 0.0.40
codegen_flags: <defaults>
</compile_context>

<pallas_src>
import functools
import math

import jax
import jax.numpy as jnp
from jax.experimental import pallas as pl
from jax.experimental.pallas import tpu as pltpu

_LANE = 128
_SUBLANE = 8
_MIB = 1024 * 1024


def _round_up(x, m):
    return ((x + m - 1) // m) * m


@functools.lru_cache(maxsize=1)
def _vmem_capacity_bytes():
    """Per-core VMEM capacity; conservative (v7x = 64 MiB) fallback."""
    try:
        return int(pltpu.get_tpu_info().vmem_capacity_bytes)
    except Exception:  # one-time probe, not on the hot path
        return 64 * _MIB


@functools.lru_cache(maxsize=1)
def _num_tensorcores():
    """TensorCores per chip usable via dimension_semantics=('parallel',)."""
    try:
        kind = (getattr(jax.devices()[0], "device_kind", "") or "").lower()
        if "v7" in kind:  # v7x: 2 TensorCores per chip
            return 2
    except Exception:
        pass
    return 1


@functools.lru_cache(maxsize=1)
def _buffered1_supported():
    """One-time probe: does this jax/Mosaic build accept pl.Buffered(1)?"""
    def _copy(x_ref, o_ref):
        o_ref[...] = x_ref[...]

    x = jnp.zeros((_SUBLANE, _LANE), jnp.float32)
    try:
        fn = pl.pallas_call(
            _copy,
            out_shape=jax.ShapeDtypeStruct((_SUBLANE, _LANE), jnp.float32),
            grid=(1,),
            in_specs=[pl.BlockSpec((_SUBLANE, _LANE), lambda i: (0, 0),
                                   pipeline_mode=pl.Buffered(1))],
            out_specs=pl.BlockSpec((_SUBLANE, _LANE), lambda i: (0, 0)),
        )
        jax.jit(fn).lower(x).compile()
        return True
    except Exception:
        return False


def _choose_batch_tile(batch, num_cores):
    """Pick a sublane-aligned batch tile balancing MXU fill, padding waste and
    per-grid-step overhead; ensure >=num_cores grid steps on multi-TC chips."""
    if batch >= 8192:
        tile = 1024
    elif batch >= 2048:
        tile = 512
    elif batch > 256:
        # Split evenly into ~256-row tiles to minimize padding waste
        # (e.g. B=300 -> 2 tiles of 152 instead of one 512 pad).
        n_tiles = pl.cdiv(batch, 256)
        tile = _round_up(pl.cdiv(batch, n_tiles), _SUBLANE)
    else:
        tile = _round_up(batch, _SUBLANE)
    if num_cores > 1 and batch >= num_cores * _SUBLANE:
        tile = min(tile, _round_up(pl.cdiv(batch, num_cores), _SUBLANE))
    return max(tile, _SUBLANE)


def _make_mlp_kernel(num_layers, compute_dtype):
    """Fused MLP kernel: z_ref, w0, b0, ..., w{L-1}, b{L-1}, out_ref.

    bf16 (or f32) matmuls with f32 accumulation; bias + ReLU in f32; ReLU after
    every layer except the last (matches DAEDecoder's Sequential).
    """

    def kernel(z_ref, *refs):
        out_ref = refs[2 * num_layers]
        h = z_ref[...].astype(compute_dtype)
        for i in range(num_layers):
            w = refs[2 * i][...]
            b = refs[2 * i + 1][...]
            acc = jnp.dot(h, w, preferred_element_type=jnp.float32)
            acc = acc + b.astype(jnp.float32)
            if i < num_layers - 1:
                acc = jnp.maximum(acc, 0.0)
                h = acc.astype(compute_dtype)  # feed the MXU in compute_dtype
            else:
                h = acc
        out_ref[...] = h.astype(out_ref.dtype)

    return kernel


class DAEDecoderPallas:
    """DAE MLP decoder fused into one Pallas TPU kernel.

    Parameters are zero-padded to lane-dense feature dims and cast to
    compute_dtype ONCE at construction (zero rows/cols are exact no-ops under
    matmul + bias + ReLU).  Each batch shape gets one cached jitted forward.
    """

    def __init__(self, weights, biases, *, compute_dtype=jnp.bfloat16,
                 out_dtype=None):
        assert len(weights) == len(biases) >= 1
        self.num_layers = len(weights)
        self.latent_dim = int(weights[0].shape[0])
        self.output_dim = int(weights[-1].shape[1])
        self.compute_dtype = jnp.dtype(compute_dtype)
        self.out_dtype = jnp.dtype(out_dtype) if out_dtype is not None else None

        dims = [self.latent_dim] + [int(w.shape[1]) for w in weights]
        self.dims_p = tuple(_round_up(d, _LANE) for d in dims)

        # ---- pad + cast parameters once (hoisted off the forward path) -----
        params = []
        for i, (w, b) in enumerate(zip(weights, biases)):
            in_p, out_p = self.dims_p[i], self.dims_p[i + 1]
            w = jnp.asarray(w)
            b = jnp.asarray(b).reshape(1, -1)
            w_p = jnp.zeros((in_p, out_p), self.compute_dtype)
            w_p = w_p.at[: w.shape[0], : w.shape[1]].set(
                w.astype(self.compute_dtype))
            b_p = jnp.zeros((1, out_p), jnp.float32)
            b_p = b_p.at[:, : b.shape[1]].set(b.astype(jnp.float32))
            params.extend([w_p, b_p])
        self.params = params
        self._param_bytes = sum(int(p.size) * p.dtype.itemsize for p in params)
        self._fwd_cache = {}

    def __call__(self, z):
        key = (int(z.shape[0]), jnp.dtype(z.dtype))
        fwd = self._fwd_cache.get(key)
        if fwd is None:
            fwd = self._build_forward(*key)
            self._fwd_cache[key] = fwd
        return fwd(z, *self.params)

    def _build_forward(self, B, z_dtype):
        num_layers = self.num_layers
        dims_p = self.dims_p
        latent_p, out_p = dims_p[0], dims_p[-1]
        latent_dim, output_dim = self.latent_dim, self.output_dim
        out_dtype = self.out_dtype if self.out_dtype is not None else z_dtype

        num_cores = _num_tensorcores()
        batch_tile = _choose_batch_tile(B, num_cores)
        B_pad = _round_up(B, batch_tile)
        grid = (B_pad // batch_tile,)

        # ---- VMEM budget & fit check ---------------------------------------
        vmem_cap = _vmem_capacity_bytes()
        single_buffer = _buffered1_supported()
        param_mult = 1 if single_buffer else 2
        io_bytes = (2 * batch_tile * latent_p * jnp.dtype(z_dtype).itemsize
                    + 2 * batch_tile * out_p * jnp.dtype(out_dtype).itemsize)
        act_bytes = 4 * batch_tile * max(dims_p) * 4  # f32 intermediates
        vmem_est = io_bytes + param_mult * self._param_bytes + act_bytes
        if param_mult * self._param_bytes + io_bytes > vmem_cap // 2:
            raise ValueError(
                "DAEDecoderPallas: whole-layer weights + I/O tiles "
                f"({(param_mult * self._param_bytes + io_bytes) / _MIB:.1f} MiB)"
                f" exceed half of per-core VMEM ({vmem_cap / _MIB:.0f} MiB); "
                "a K/N weight-tiling path is required for this configuration.")
        # TODO(synk): add a K/N-tiled weight path for layers too large to hold
        # whole in VMEM (mainly a v7x 64 MiB concern).
        vmem_limit = int(min(max(2 * vmem_est, 4 * _MIB), (vmem_cap * 3) // 4))

        kernel = _make_mlp_kernel(num_layers, self.compute_dtype)

        in_specs = [pl.BlockSpec((batch_tile, latent_p), lambda i: (i, 0))]
        for p in self.params:
            if single_buffer:
                in_specs.append(pl.BlockSpec(p.shape, lambda i: (0, 0),
                                             pipeline_mode=pl.Buffered(1)))
            else:
                in_specs.append(pl.BlockSpec(p.shape, lambda i: (0, 0)))

        flops = 2 * B_pad * sum(dims_p[i] * dims_p[i + 1]
                                for i in range(num_layers))
        bytes_accessed = (B_pad * latent_p * jnp.dtype(z_dtype).itemsize
                          + B_pad * out_p * jnp.dtype(out_dtype).itemsize
                          + self._param_bytes)
        cost = pl.CostEstimate(flops=flops, transcendentals=0,
                               bytes_accessed=bytes_accessed)

        call = pl.pallas_call(
            kernel,
            out_shape=jax.ShapeDtypeStruct((B_pad, out_p), out_dtype),
            grid=grid,
            in_specs=in_specs,
            out_specs=pl.BlockSpec((batch_tile, out_p), lambda i: (i, 0)),
            compiler_params=pltpu.CompilerParams(
                dimension_semantics=("parallel",),
                vmem_limit_bytes=vmem_limit,
                # Allow XLA to fuse the cheap z pad into the kernel's input
                # instead of materializing a padded copy in HBM.
                allow_input_fusion=[True] + [False] * (2 * num_layers),
            ),
            cost_estimate=cost,
        )

        @jax.jit
        def forward(z, *params):
            # NOTE: padded batch rows / feature lanes are exact zeros and only
            # ever pass through matmul + bias + ReLU (no batch reductions), so
            # they cannot contaminate real rows; they are sliced off below.
            z_p = jnp.pad(z, ((0, B_pad - B), (0, latent_p - latent_dim)))
            out = call(z_p, *params)
            return out[:B, :output_dim]

        return forward


def init_dae_decoder_params(key, latent_dim, hidden_dims, output_dim,
                            dtype=jnp.float32):
    """Deterministic synthetic parameters matching DAEDecoder.__init__ shapes.

    weights[i]: [in_i, out_i] (transposed vs. nn.Linear), biases[i]: [1, out_i].
    """
    dims = [latent_dim] + list(hidden_dims) + [output_dim]
    weights, biases = [], []
    for i in range(len(dims) - 1):
        key, wk, bk = jax.random.split(key, 3)
        fan_in, fan_out = dims[i], dims[i + 1]
        bound = 1.0 / math.sqrt(fan_in)  # PyTorch Linear default init range
        weights.append(jax.random.uniform(wk, (fan_in, fan_out), dtype,
                                          minval=-bound, maxval=bound))
        biases.append(jax.random.uniform(bk, (1, fan_out), dtype,
                                         minval=-bound, maxval=bound))
    return weights, biases


def dae_decoder_reference(z, weights, biases):
    """Pure-JAX (f32) reference for the same forward pass."""
    h = z
    n = len(weights)
    for i, (w, b) in enumerate(zip(weights, biases)):
        h = h @ w + b
        if i < n - 1:
            h = jnp.maximum(h, 0.0)
    return h


if __name__ == "__main__":
    latent_dim = 32
    hidden_dims = [64, 128]
    output_dim = 48
    batch = 16

    key = jax.random.PRNGKey(0)
    key, zk = jax.random.split(key)
    z = jax.random.normal(zk, (batch, latent_dim), jnp.float32)
    weights, biases = init_dae_decoder_params(
        key, latent_dim, hidden_dims, output_dim)

    ref = dae_decoder_reference(z, weights, biases)

    # Exact path (f32 matmuls) — tight tolerance.
    dec_f32 = DAEDecoderPallas(weights, biases, compute_dtype=jnp.float32)
    out_f32 = jax.block_until_ready(dec_f32(z))
    assert out_f32.shape == (batch, output_dim)
    assert jnp.allclose(out_f32, ref, atol=1e-5, rtol=1e-5), "f32 mismatch"

    # Default fast path (bf16 matmuls, f32 accumulation) — dtype-appropriate
    # tolerance.
    dec = DAEDecoderPallas(weights, biases)
    out = jax.block_until_ready(dec(z))
    assert out.shape == (batch, output_dim)
    assert out.dtype == z.dtype
    assert jnp.allclose(out, ref, atol=5e-2, rtol=5e-2), "bf16 mismatch"

    print("KERNEL_OK")
</pallas_src>

<mosaic_0001>
module attributes {stable_mosaic.version = 11 : i64} {
  func.func @kernel(%arg0: i32, %arg1: memref<16x128xf32, #tpu.memory_space<vmem>>, %arg2: memref<128x128xf32, #tpu.memory_space<vmem>>, %arg3: memref<1x128xf32, #tpu.memory_space<vmem>>, %arg4: memref<128x128xf32, #tpu.memory_space<vmem>>, %arg5: memref<1x128xf32, #tpu.memory_space<vmem>>, %arg6: memref<128x128xf32, #tpu.memory_space<vmem>>, %arg7: memref<1x128xf32, #tpu.memory_space<vmem>>, %arg8: memref<16x128xf32, #tpu.memory_space<vmem>>) attributes {dimension_semantics = [#tpu.dimension_semantics<parallel>], iteration_bounds = array<i64: 1>, scalar_prefetch = 0 : i64, scratch_operands = 0 : i64, tpu.core_type = #tpu.core_type<tc>, window_params = [{transform_indices = @transform_0, window_bounds = array<i64: 16, 128>}, {pipeline_mode = #tpu.pipeline_mode<synchronous>, transform_indices = @transform_1, window_bounds = array<i64: 128, 128>}, {pipeline_mode = #tpu.pipeline_mode<synchronous>, transform_indices = @transform_2, window_bounds = array<i64: 1, 128>}, {pipeline_mode = #tpu.pipeline_mode<synchronous>, transform_indices = @transform_3, window_bounds = array<i64: 128, 128>}, {pipeline_mode = #tpu.pipeline_mode<synchronous>, transform_indices = @transform_4, window_bounds = array<i64: 1, 128>}, {pipeline_mode = #tpu.pipeline_mode<synchronous>, transform_indices = @transform_5, window_bounds = array<i64: 128, 128>}, {pipeline_mode = #tpu.pipeline_mode<synchronous>, transform_indices = @transform_6, window_bounds = array<i64: 1, 128>}, {transform_indices = @transform_7, window_bounds = array<i64: 16, 128>}]} {
    %c0 = arith.constant 0 : index
    %c0_0 = arith.constant 0 : index
    %0 = vector.load %arg1[%c0, %c0_0] : memref<16x128xf32, #tpu.memory_space<vmem>>, vector<16x128xf32>
    %c0_1 = arith.constant 0 : index
    %c0_2 = arith.constant 0 : index
    %1 = vector.load %arg2[%c0_1, %c0_2] : memref<128x128xf32, #tpu.memory_space<vmem>>, vector<128x128xf32>
    %c0_3 = arith.constant 0 : index
    %c0_4 = arith.constant 0 : index
    %2 = vector.load %arg3[%c0_3, %c0_4] : memref<1x128xf32, #tpu.memory_space<vmem>>, vector<1x128xf32>
    %cst = arith.constant dense<0.000000e+00> : vector<16x128xf32>
    %3 = tpu.matmul %0, %1, %cst {dimension_numbers = #tpu.dot_dimension_numbers<[1], [0], [0], [1], [0, 0, 1, 1], [], []>} : vector<16x128xf32>, vector<128x128xf32>, vector<16x128xf32> -> vector<16x128xf32>
    %4 = vector.broadcast %2 : vector<1x128xf32> to vector<16x128xf32>
    %5 = arith.addf %3, %4 : vector<16x128xf32>
    %cst_5 = arith.constant 0.000000e+00 : f32
    %6 = vector.broadcast %cst_5 : f32 to vector<16x128xf32>
    %7 = arith.maximumf %5, %6 : vector<16x128xf32>
    %c0_6 = arith.constant 0 : index
    %c0_7 = arith.constant 0 : index
    %8 = vector.load %arg4[%c0_6, %c0_7] : memref<128x128xf32, #tpu.memory_space<vmem>>, vector<128x128xf32>
    %c0_8 = arith.constant 0 : index
    %c0_9 = arith.constant 0 : index
    %9 = vector.load %arg5[%c0_8, %c0_9] : memref<1x128xf32, #tpu.memory_space<vmem>>, vector<1x128xf32>
    %cst_10 = arith.constant dense<0.000000e+00> : vector<16x128xf32>
    %10 = tpu.matmul %7, %8, %cst_10 {dimension_numbers = #tpu.dot_dimension_numbers<[1], [0], [0], [1], [0, 0, 1, 1], [], []>} : vector<16x128xf32>, vector<128x128xf32>, vector<16x128xf32> -> vector<16x128xf32>
    %11 = vector.broadcast %9 : vector<1x128xf32> to vector<16x128xf32>
    %12 = arith.addf %10, %11 : vector<16x128xf32>
    %cst_11 = arith.constant 0.000000e+00 : f32
    %13 = vector.broadcast %cst_11 : f32 to vector<16x128xf32>
    %14 = arith.maximumf %12, %13 : vector<16x128xf32>
    %c0_12 = arith.constant 0 : index
    %c0_13 = arith.constant 0 : index
    %15 = vector.load %arg6[%c0_12, %c0_13] : memref<128x128xf32, #tpu.memory_space<vmem>>, vector<128x128xf32>
    %c0_14 = arith.constant 0 : index
    %c0_15 = arith.constant 0 : index
    %16 = vector.load %arg7[%c0_14, %c0_15] : memref<1x128xf32, #tpu.memory_space<vmem>>, vector<1x128xf32>
    %cst_16 = arith.constant dense<0.000000e+00> : vector<16x128xf32>
    %17 = tpu.matmul %14, %15, %cst_16 {dimension_numbers = #tpu.dot_dimension_numbers<[1], [0], [0], [1], [0, 0, 1, 1], [], []>} : vector<16x128xf32>, vector<128x128xf32>, vector<16x128xf32> -> vector<16x128xf32>
    %18 = vector.broadcast %16 : vector<1x128xf32> to vector<16x128xf32>
    %19 = arith.addf %17, %18 : vector<16x128xf32>
    %c0_17 = arith.constant 0 : index
    %c0_18 = arith.constant 0 : index
    %20 = vector.load %arg8[%c0_17, %c0_18] : memref<16x128xf32, #tpu.memory_space<vmem>>, vector<16x128xf32>
    tpu.vector_store %arg8[%c0_17, %c0_18], %19 {strides = array<i32>} : memref<16x128xf32, #tpu.memory_space<vmem>>, vector<16x128xf32>,
    return
  }
  func.func @transform_0(%arg0: i32) -> (i32, i32) {
    %c0_i32 = arith.constant 0 : i32
    %c0_i32_0 = arith.constant 0 : i32
    return %arg0, %c0_i32 : i32, i32
  }
  func.func @transform_1(%arg0: i32) -> (i32, i32) {
    %c0_i32 = arith.constant 0 : i32
    %c0_i32_0 = arith.constant 0 : i32
    %c0_i32_1 = arith.constant 0 : i32
    return %c0_i32, %c0_i32_0 : i32, i32
  }
  func.func @transform_2(%arg0: i32) -> (i32, i32) {
    %c0_i32 = arith.constant 0 : i32
    %c0_i32_0 = arith.constant 0 : i32
    %c0_i32_1 = arith.constant 0 : i32
    return %c0_i32, %c0_i32_0 : i32, i32
  }
  func.func @transform_3(%arg0: i32) -> (i32, i32) {
    %c0_i32 = arith.constant 0 : i32
    %c0_i32_0 = arith.constant 0 : i32
    %c0_i32_1 = arith.constant 0 : i32
    return %c0_i32, %c0_i32_0 : i32, i32
  }
  func.func @transform_4(%arg0: i32) -> (i32, i32) {
    %c0_i32 = arith.constant 0 : i32
    %c0_i32_0 = arith.constant 0 : i32
    %c0_i32_1 = arith.constant 0 : i32
    return %c0_i32, %c0_i32_0 : i32, i32
  }
  func.func @transform_5(%arg0: i32) -> (i32, i32) {
    %c0_i32 = arith.constant 0 : i32
    %c0_i32_0 = arith.constant 0 : i32
    %c0_i32_1 = arith.constant 0 : i32
    return %c0_i32, %c0_i32_0 : i32, i32
  }
  func.func @transform_6(%arg0: i32) -> (i32, i32) {
    %c0_i32 = arith.constant 0 : i32
    %c0_i32_0 = arith.constant 0 : i32
    %c0_i32_1 = arith.constant 0 : i32
    return %c0_i32, %c0_i32_0 : i32, i32
  }
  func.func @transform_7(%arg0: i32) -> (i32, i32) {
    %c0_i32 = arith.constant 0 : i32
    %c0_i32_0 = arith.constant 0 : i32
    return %arg0, %c0_i32 : i32, i32
  }
}

</mosaic_0001>

<llo_original>
// kernel: forward.2
$region0: #{forward.2}
  #allocation0 [shape = 'u32[]', space=smem, size = 0x4, offset = 0x4, fixed_abs, tag = 'smem constant byte address 0x4 - core index']
  #allocation1 [shape = 'u32[72,128]{1,0:T(1,128)}', space=vmem, size = 0x9000, scoped, tag = 'internal scratch']
  #allocation2 [shape = 'u32[2048]{0}', space=vmem, size = 0x2000, scoped, tag = 'scoped memory for forward.2']
  #allocation3 [shape = 'u32[2048]{0}', space=vmem, size = 0x2000, scoped, tag = 'scoped memory for forward.2']
  #allocation4 [shape = 'u32[2048]{0}', space=vmem, size = 0x2000, scoped, tag = 'scoped memory for forward.2']
  #allocation5 [shape = 'u32[2048]{0}', space=vmem, size = 0x2000, scoped, tag = 'scoped memory for forward.2']
  #allocation6 [shape = 'u32[2048]{0}', space=vmem, size = 0x2000, scoped, tag = 'scoped memory for forward.2']
  %s0 = inlined_call_operand.hbm [shape: f32[128,128], index: 0, kind: input, shape index: {}]
  %s1 = inlined_call_operand.vmem [shape: f32[1,128], index: 1, kind: input, shape index: {}]
  %s2 = inlined_call_operand.hbm [shape: f32[128,128], index: 2, kind: input, shape index: {}]
  %s3 = inlined_call_operand.vmem [shape: f32[1,128], index: 3, kind: input, shape index: {}]
  %s4 = inlined_call_operand.hbm [shape: f32[128,128], index: 4, kind: input, shape index: {}]
  %s5 = inlined_call_operand.vmem [shape: f32[1,128], index: 5, kind: input, shape index: {}]
  %s6 = inlined_call_operand.hbm [shape: f32[16,32], index: 6, kind: input, shape index: {}]
  %s7 = inlined_call_operand.<no memory space> [shape: f32[], index: 7, kind: input, shape index: {}]
  %s8 = inlined_call_operand.hbm [shape: f32[16,128], index: 8, kind: output, shape index: {}]
  %s9 = sld [smem:[#allocation0]]
  $region54: #{forward.2} parent=0
    _
  %s11 = ssub.s32 1, %s9
  %s12 = scalar_select 0, %s11, %s9
  %v13 = vstv %s7
  $region1: #{forward.2} parent=0
    #allocation7 [shape = 'u8[8192]{0}', space=vmem, size = 0x2000, scoped, tag = 'operand span for operand 6']
    #allocation8 [shape = 's32[1]{0}', space=sflag, size = 0x4, scoped, tag = 'scoped memory for forward.2']
    #allocation9 [shape = 's32[1]{0}', space=sflag, size = 0x4, scoped, tag = 'scoped memory for forward.2']
    #allocation10 [shape = 'u8[65536]{0}', space=vmem, size = 0x10000, scoped, tag = 'input window, operand 1, single buffered']
    #allocation11 [shape = 's32[1]{0}', space=sflag, size = 0x4, scoped, tag = 'scoped memory for forward.2']
    #allocation12 [shape = 'u8[65536]{0}', space=vmem, size = 0x10000, scoped, tag = 'input window, operand 3, single buffered']
    #allocation13 [shape = 'u8[65536]{0}', space=vmem, size = 0x10000, scoped, tag = 'input window, operand 5, single buffered']
    #allocation14 [shape = 's32[1]{0}', space=sflag, size = 0x4, scoped, tag = 'scoped memory for forward.2']
    #allocation15 [shape = 'u8[8192]{0}', space=vmem, size = 0x2000, scoped, tag = 'output window, operand 0, single buffered']
    #allocation16 [shape = 'u8[8192]{0}', space=vmem, size = 0x2000, dematerialized = true, scoped, tag = 'FusionAdapter Buffer %fusion.1 = f32[16,128]{1,0:T(8,128)} fusion(%param_6.1, %param_7), kind=kLoop, calls=%fused_computation.1.clone, metadata={op_name="jit(forward)/jit(_pad)/pad" stack_frame_id=1}']
    %14 = vsyncpa [#allocation8], 0
    %15 = vsyncpa [#allocation11], 0
    %16 = vsyncpa [#allocation14], 0
    %17 = vsyncpa [#allocation9], 0
    // Predicated region
    $region2: #{forward.2} parent=1 // pred_check
      _
    $region3: #{forward.2} parent=1 // pred_check_branch
      %19 = sbr.rel (0) target = $region5
    $region4: #{forward.2} parent=1 // pred_region
      %21 = vsyncadd [#allocation8], 0
      %s22 = sshll.u32 %s6, 4
      %s23 = int_to_ptr.hbm [resolvable:$true] %s22
      %s24 = sshll.u32 [#allocation7], 4
      %s25 = int_to_ptr.vmem [resolvable:$true] %s24
      %30 = dma.hbm_to_vmem [thread:$0]  %s23, 256, %s25, [#allocation8], 128, 128, 8
    $region5: #{forward.2} parent=1 // pred_fallthru
      _
    // Predicated region
    $region6: #{forward.2} parent=1 // pred_check
      _
    $region7: #{forward.2} parent=1 // pred_check_branch
      %32 = sbr.rel (0) target = $region9
    $region8: #{forward.2} parent=1 // pred_region
      %34 = vsyncadd [#allocation11], 0
      %s35 = sshll.u32 %s0, 4
      %s36 = int_to_ptr.hbm [resolvable:$true] %s35
      %s37 = sshll.u32 [#allocation10], 4
      %s38 = int_to_ptr.vmem [resolvable:$true] %s37
      %43 = dma.hbm_to_vmem [thread:$0]  %s36, 2048, %s38, [#allocation11], 128, 128, 8
    $region9: #{forward.2} parent=1 // pred_fallthru
      _
    // Predicated region
    $region10: #{forward.2} parent=1 // pred_check
      _
    $region11: #{forward.2} parent=1 // pred_check_branch
      %45 = sbr.rel (0) target = $region13
    $region12: #{forward.2} parent=1 // pred_region
      _
    $region13: #{forward.2} parent=1 // pred_fallthru
      _
    // Predicated region
    $region14: #{forward.2} parent=1 // pred_check
      _
    $region15: #{forward.2} parent=1 // pred_check_branch
      %47 = sbr.rel (0) target = $region17
    $region16: #{forward.2} parent=1 // pred_region
      %49 = vsyncadd [#allocation11], 0
      %s50 = sshll.u32 %s2, 4
      %s51 = int_to_ptr.hbm [resolvable:$true] %s50
      %s52 = sshll.u32 [#allocation12], 4
      %s53 = int_to_ptr.vmem [resolvable:$true] %s52
      %58 = dma.hbm_to_vmem [thread:$0]  %s51, 2048, %s53, [#allocation11], 128, 128, 8
    $region17: #{forward.2} parent=1 // pred_fallthru
      _
    // Predicated region
    $region18: #{forward.2} parent=1 // pred_check
      _
    $region19: #{forward.2} parent=1 // pred_check_branch
      %60 = sbr.rel (0) target = $region21
    $region20: #{forward.2} parent=1 // pred_region
      _
    $region21: #{forward.2} parent=1 // pred_fallthru
      _
    // Predicated region
    $region22: #{forward.2} parent=1 // pred_check
      _
    $region23: #{forward.2} parent=1 // pred_check_branch
      %62 = sbr.rel (0) target = $region25
    $region24: #{forward.2} parent=1 // pred_region
      %64 = vsyncadd [#allocation14], 0
      %s65 = sshll.u32 %s4, 4
      %s66 = int_to_ptr.hbm [resolvable:$true] %s65
      %s67 = sshll.u32 [#allocation13], 4
      %s68 = int_to_ptr.vmem [resolvable:$true] %s67
      %73 = dma.hbm_to_vmem [thread:$0]  %s66, 2048, %s68, [#allocation14], 128, 128, 8
    $region25: #{forward.2} parent=1 // pred_fallthru
      _
    // Predicated region
    $region26: #{forward.2} parent=1 // pred_check
      _
    $region27: #{forward.2} parent=1 // pred_check_branch
      %75 = sbr.rel (0) target = $region29
    $region28: #{forward.2} parent=1 // pred_region
      _
    $region29: #{forward.2} parent=1 // pred_fallthru
      _
    // Predicated region
    $region30: #{forward.2} parent=1 // pred_check
      _
    $region31: #{forward.2} parent=1 // pred_check_branch
      %77 = sbr.rel (0) target = $region33
    $region32: #{forward.2} parent=1 // pred_region
      %79 = dma.done [#allocation8], 256
    $region33: #{forward.2} parent=1 // pred_fallthru
      _
    // Predicated region
    $region34: #{forward.2} parent=1 // pred_check
      _
    $region35: #{forward.2} parent=1 // pred_check_branch
      %81 = sbr.rel (0) target = $region37
    $region36: #{forward.2} parent=1 // pred_region
      %83 = dma.done [#allocation11], 2048
    $region37: #{forward.2} parent=1 // pred_fallthru
      _
    // Predicated region
    $region38: #{forward.2} parent=1 // pred_check
      _
    $region39: #{forward.2} parent=1 // pred_check_branch
      %85 = sbr.rel (0) target = $region41
    $region40: #{forward.2} parent=1 // pred_region
      %87 = dma.done [#allocation11], 2048
    $region41: #{forward.2} parent=1 // pred_fallthru
      _
    // Predicated region
    $region42: #{forward.2} parent=1 // pred_check
      _
    $region43: #{forward.2} parent=1 // pred_check_branch
      %89 = sbr.rel (0) target = $region45
    $region44: #{forward.2} parent=1 // pred_region
      %91 = dma.done [#allocation14], 2048
    $region45: #{forward.2} parent=1 // pred_fallthru
      _
    %v92 = vld [vmem:[#allocation7] sm:$0xff]
    %v93 = vlaneseq
    %v94 = vand.u32 %v93, 127
    %vm96 = vcmp.lt.s32.totalorder %v94, 32
    %v97 = vsel %vm96, %v92, %v13
    %s99 = ssub.s32 256, 1
    %100 = vst [vmem:[#allocation16] sm:%s99] %v97
    %s101 = scalar_lea.vmem [#allocation7], 8
    %v102 = vld [vmem:[%s101] sm:$0xff]
    %v103 = vlaneseq
    %v104 = vand.u32 %v103, 127
    %vm106 = vcmp.lt.s32.totalorder %v104, 32
    %v107 = vsel %vm106, %v102, %v13
    %s108 = scalar_lea.vmem [#allocation16], 8
    %s110 = ssub.s32 256, 1
    %111 = vst [vmem:[%s108] sm:%s110] %v107
    %v112 = vld [vmem:[#allocation16] sm:$0xff]
    %v113 = vld [vmem:[#allocation16 + $0x8] sm:$0xff]
    %v114 = vld [vmem:[#allocation10] sm:$0xff]
    %v115 = vld [vmem:[#allocation10 + $0x8] sm:$0xff]
    %v116 = vld [vmem:[#allocation10 + $0x10] sm:$0xff]
    %v117 = vld [vmem:[#allocation10 + $0x18] sm:$0xff]
    %v118 = vld [vmem:[#allocation10 + $0x20] sm:$0xff]
    %v119 = vld [vmem:[#allocation10 + $0x28] sm:$0xff]
    %v120 = vld [vmem:[#allocation10 + $0x30] sm:$0xff]
    %v121 = vld [vmem:[#allocation10 + $0x38] sm:$0xff]
    %v122 = vld [vmem:[#allocation10 + $0x40] sm:$0xff]
    %v123 = vld [vmem:[#allocation10 + $0x48] sm:$0xff]
    %v124 = vld [vmem:[#allocation10 + $0x50] sm:$0xff]
    %v125 = vld [vmem:[#allocation10 + $0x58] sm:$0xff]
    %v126 = vld [vmem:[#allocation10 + $0x60] sm:$0xff]
    %v127 = vld [vmem:[#allocation10 + $0x68] sm:$0xff]
    %v128 = vld [vmem:[#allocation10 + $0x70] sm:$0xff]
    %v129 = vld [vmem:[#allocation10 + $0x78] sm:$0xff]
    %v130 = vld [vmem:[%s1] sm:$0x1]
    %v132 = vperm.slane %v130, 0
    %134 = vmatpush.msra.mxu0 %v129
    %135 = vmatpush.msra.mxu0 %v128
    %136 = vmatpush.msra.mxu0 %v127
    %137 = vmatpush.msra.mxu0 %v126
    %138 = vmatpush.msra.mxu0 %v125
    %139 = vmatpush.msra.mxu0 %v124
    %140 = vmatpush.msra.mxu0 %v123
    %141 = vmatpush.msra.mxu0 %v122
    %142 = vmatpush.msra.mxu0 %v121
    %143 = vmatpush.msra.mxu0 %v120
    %144 = vmatpush.msra.mxu0 %v119
    %145 = vmatpush.msra.mxu0 %v118
    %146 = vmatpush.msra.mxu0 %v117
    %147 = vmatpush.msra.mxu0 %v116
    %148 = vmatpush.msra.mxu0 %v115
    %149 = vmatpush.msra.mxu0 %v114
    %150 = vmatmul.f32.gmra.mxu0 %v112
    %v151 = vpop.f32.mrf.mxu0
    %v152 = vadd.f32 %v132, %v151
    %153 = vmatmul.f32.gmra.mxu0 %v113
    %v154 = vpop.f32.mrf.mxu0
    %v155 = vadd.f32 %v132, %v154
    %156 = vdwg.mxu0
    %v157 = vmax.f32 %v152, 0.0
    %v158 = vmax.f32 %v155, 0.0
    %v159 = vld [vmem:[#allocation12] sm:$0xff]
    %v160 = vld [vmem:[#allocation12 + $0x8] sm:$0xff]
    %v161 = vld [vmem:[#allocation12 + $0x10] sm:$0xff]
    %v162 = vld [vmem:[#allocation12 + $0x18] sm:$0xff]
    %v163 = vld [vmem:[#allocation12 + $0x20] sm:$0xff]
    %v164 = vld [vmem:[#allocation12 + $0x28] sm:$0xff]
    %v165 = vld [vmem:[#allocation12 + $0x30] sm:$0xff]
    %v166 = vld [vmem:[#allocation12 + $0x38] sm:$0xff]
    %v167 = vld [vmem:[#allocation12 + $0x40] sm:$0xff]
    %v168 = vld [vmem:[#allocation12 + $0x48] sm:$0xff]
    %v169 = vld [vmem:[#allocation12 + $0x50] sm:$0xff]
    %v170 = vld [vmem:[#allocation12 + $0x58] sm:$0xff]
    %v171 = vld [vmem:[#allocation12 + $0x60] sm:$0xff]
    %v172 = vld [vmem:[#allocation12 + $0x68] sm:$0xff]
    %v173 = vld [vmem:[#allocation12 + $0x70] sm:$0xff]
    %v174 = vld [vmem:[#allocation12 + $0x78] sm:$0xff]
    %v175 = vld [vmem:[%s3] sm:$0x1]
    %v177 = vperm.slane %v175, 0
    %179 = vmatpush.msra.mxu0 %v174
    %180 = vmatpush.msra.mxu0 %v173
    %181 = vmatpush.msra.mxu0 %v172
    %182 = vmatpush.msra.mxu0 %v171
    %183 = vmatpush.msra.mxu0 %v170
    %184 = vmatpush.msra.mxu0 %v169
    %185 = vmatpush.msra.mxu0 %v168
    %186 = vmatpush.msra.mxu0 %v167
    %187 = vmatpush.msra.mxu0 %v166
    %188 = vmatpush.msra.mxu0 %v165
    %189 = vmatpush.msra.mxu0 %v164
    %190 = vmatpush.msra.mxu0 %v163
    %191 = vmatpush.msra.mxu0 %v162
    %192 = vmatpush.msra.mxu0 %v161
    %193 = vmatpush.msra.mxu0 %v160
    %194 = vmatpush.msra.mxu0 %v159
    %195 = vmatmul.f32.gmra.mxu0 %v157
    %v196 = vpop.f32.mrf.mxu0
    %v197 = vadd.f32 %v177, %v196
    %198 = vmatmul.f32.gmra.mxu0 %v158
    %v199 = vpop.f32.mrf.mxu0
    %v200 = vadd.f32 %v177, %v199
    %201 = vdwg.mxu0
    %v202 = vmax.f32 %v197, 0.0
    %v203 = vmax.f32 %v200, 0.0
    %v204 = vld [vmem:[#allocation13] sm:$0xff]
    %v205 = vld [vmem:[#allocation13 + $0x8] sm:$0xff]
    %v206 = vld [vmem:[#allocation13 + $0x10] sm:$0xff]
    %v207 = vld [vmem:[#allocation13 + $0x18] sm:$0xff]
    %v208 = vld [vmem:[#allocation13 + $0x20] sm:$0xff]
    %v209 = vld [vmem:[#allocation13 + $0x28] sm:$0xff]
    %v210 = vld [vmem:[#allocation13 + $0x30] sm:$0xff]
    %v211 = vld [vmem:[#allocation13 + $0x38] sm:$0xff]
    %v212 = vld [vmem:[#allocation13 + $0x40] sm:$0xff]
    %v213 = vld [vmem:[#allocation13 + $0x48] sm:$0xff]
    %v214 = vld [vmem:[#allocation13 + $0x50] sm:$0xff]
    %v215 = vld [vmem:[#allocation13 + $0x58] sm:$0xff]
    %v216 = vld [vmem:[#allocation13 + $0x60] sm:$0xff]
    %v217 = vld [vmem:[#allocation13 + $0x68] sm:$0xff]
    %v218 = vld [vmem:[#allocation13 + $0x70] sm:$0xff]
    %v219 = vld [vmem:[#allocation13 + $0x78] sm:$0xff]
    %v220 = vld [vmem:[%s5] sm:$0x1]
    %v222 = vperm.slane %v220, 0
    %224 = vmatpush.msra.mxu0 %v219
    %225 = vmatpush.msra.mxu0 %v218
    %226 = vmatpush.msra.mxu0 %v217
    %227 = vmatpush.msra.mxu0 %v216
    %228 = vmatpush.msra.mxu0 %v215
    %229 = vmatpush.msra.mxu0 %v214
    %230 = vmatpush.msra.mxu0 %v213
    %231 = vmatpush.msra.mxu0 %v212
    %232 = vmatpush.msra.mxu0 %v211
    %233 = vmatpush.msra.mxu0 %v210
    %234 = vmatpush.msra.mxu0 %v209
    %235 = vmatpush.msra.mxu0 %v208
    %236 = vmatpush.msra.mxu0 %v207
    %237 = vmatpush.msra.mxu0 %v206
    %238 = vmatpush.msra.mxu0 %v205
    %239 = vmatpush.msra.mxu0 %v204
    %240 = vmatmul.f32.gmra.mxu0 %v202
    %v241 = vpop.f32.mrf.mxu0
    %v242 = vadd.f32 %v222, %v241
    %243 = vmatmul.f32.gmra.mxu0 %v203
    %v244 = vpop.f32.mrf.mxu0
    %v245 = vadd.f32 %v222, %v244
    %246 = vdwg.mxu0
    %247 = vst [vmem:[#allocation15] sm:$0xff] %v242
    %248 = vst [vmem:[#allocation15 + $0x8] sm:$0xff] %v245
    // Predicated region
    $region46: #{forward.2} parent=1 // pred_check
      _
    $region47: #{forward.2} parent=1 // pred_check_branch
      %250 = sbr.rel (0) target = $region49
    $region48: #{forward.2} parent=1 // pred_region
      %252 = vsyncadd [#allocation9], 0
      %s253 = sshll.u32 [#allocation15], 4
      %s254 = int_to_ptr.vmem [resolvable:$true] %s253
      %s255 = sshll.u32 %s8, 4
      %s256 = int_to_ptr.hbm [resolvable:$true] %s255
      %261 = dma.vmem_to_hbm [thread:$0]  %s254, 256, %s256, [#allocation9], 128, 128, 8
    $region49: #{forward.2} parent=1 // pred_fallthru
      _
    // Predicated region
    $region50: #{forward.2} parent=1 // pred_check
      _
    $region51: #{forward.2} parent=1 // pred_check_branch
      %263 = sbr.rel (0) target = $region53
    $region52: #{forward.2} parent=1 // pred_region
      %265 = dma.done [#allocation9], 256
    $region53: #{forward.2} parent=1 // pred_fallthru
      _
    %266 = vsyncpa [#allocation8], 1
    %267 = vsyncpa [#allocation11], 1
    %268 = vsyncpa [#allocation14], 1
    %269 = vsyncpa [#allocation9], 1

</llo_original>
